<compile_context>
chip_gen: v7x
topology: tpu7x:2x2x1
jax: 0.10.0
libtpu: 0.0.40
codegen_flags: <defaults>
</compile_context>

<pallas_src>
import functools
import math

import jax
import jax.numpy as jnp
import numpy as np
from jax import lax
from jax.experimental import pallas as pl
from jax.experimental.pallas import tpu as pltpu

HIDDEN = 128
HALF = 64


def _round_up(x, m):
    return ((x + m - 1) // m) * m


def _choose_batch_tile(B, tb_max):
    """Big tiles (amortize ~0.35us/step pipeline overhead) but keep ~4 grid
    steps for large batches so the 'parallel' axis shards across v7x's 2 TCs."""
    b8 = _round_up(B, 8)
    if b8 <= 1024:
        return b8                                  # single step; small batch
    tile = _round_up(-(-b8 // 4), 8)               # aim for ~4 grid steps
    return max(512, min(tile, _round_up(tb_max, 8)))


def policy_kernel(s_ref, w1_ref, b1_ref, w2_ref, b2_ref, wh_ref, bh_ref,
                  out_ref, *, action_dim):
    cdt = w2_ref.dtype  # MXU input dtype (bf16 by default), accumulation f32

    # Trunk: Linear(state_dim,128)+ReLU -> Linear(128,128)+ReLU.
    h1 = jnp.dot(s_ref[...], w1_ref[...], preferred_element_type=jnp.float32)
    h1 = jnp.maximum(h1 + b1_ref[...], 0.0)
    h2 = jnp.dot(h1.astype(cdt), w2_ref[...],
                 preferred_element_type=jnp.float32)
    h2 = jnp.maximum(h2 + b2_ref[...], 0.0)

    # Fused heads: single K=128, N=128 matmul.  Lanes [0,A) actor mean,
    # [A,2A) actor std, lane 2A critic value, rest zero padding.
    z = jnp.dot(h2.astype(cdt), wh_ref[...],
                preferred_element_type=jnp.float32) + bh_ref[...]

    A = action_dim
    lane = lax.broadcasted_iota(jnp.int32, z.shape, 1)
    # One EUP pass: sigmoid(x) == 0.5 * (1 + tanh(0.5 * x)).
    u = jnp.where(lane < A, z, 0.5 * z)
    t = jnp.tanh(u)
    out = jnp.where(lane < A, t,
                    jnp.where(lane < 2 * A, 0.5 * t + 0.5, z))
    out_ref[...] = out.astype(out_ref.dtype)   # lane-dense slab -> unmasked vst


def _pack_heads(params, action_dim):
    """Pack wa/ws/wc (and biases) into one [128,128] weight / [1,128] bias."""
    A = action_dim
    wh = jnp.zeros((HIDDEN, HIDDEN), jnp.float32)
    wh = wh.at[:HALF, :A].set(params["wa"])
    wh = wh.at[:HALF, A:2 * A].set(params["ws"])
    wh = wh.at[HALF:, 2 * A:2 * A + 1].set(params["wc"])
    bh = jnp.zeros((1, HIDDEN), jnp.float32)
    bh = bh.at[:, :A].set(params["ba"])
    bh = bh.at[:, A:2 * A].set(params["bs"])
    bh = bh.at[:, 2 * A:2 * A + 1].set(params["bc"])
    return wh, bh


def prepare_params(params, *, compute_dtype=jnp.bfloat16):
    """One-time (per parameter update) packing + casting, hoisted out of the
    per-call path.  Matmul operands are cast to compute_dtype; biases stay f32
    (kernel accumulation is always f32)."""
    A = params["wa"].shape[1]
    assert 2 * A + 1 <= HIDDEN, "action_dim too large for fused 128-lane heads"
    wh, bh = _pack_heads(params, A)
    packed = dict(
        w1=params["w1"].astype(compute_dtype),
        b1=params["b1"].astype(jnp.float32),
        w2=params["w2"].astype(compute_dtype),
        b2=params["b2"].astype(jnp.float32),
        wh=wh.astype(compute_dtype),
        bh=bh,
    )
    return packed, A


@functools.partial(jax.jit, static_argnames=("action_dim", "tb_max", "out_dtype"))
def _policy_forward(states, w1, b1, w2, b2, wh, bh, *,
                    action_dim, tb_max, out_dtype):
    B, S = states.shape
    A = action_dim
    compute_dtype = w1.dtype

    tb = _choose_batch_tile(B, tb_max)
    B_pad = _round_up(B, tb)
    x = states.astype(compute_dtype)
    if B_pad != B:
        x = jnp.pad(x, ((0, B_pad - B), (0, 0)))
    grid = (B_pad // tb,)

    def batch_spec(dim):
        return pl.BlockSpec((tb, dim), lambda i: (i, 0))

    def weight_spec(shape):
        return pl.BlockSpec(shape, lambda i: (0, 0))

    csz = w1.dtype.itemsize
    osz = np.dtype(out_dtype).itemsize
    flops = 2 * B_pad * (S * HIDDEN + 2 * HIDDEN * HIDDEN)
    transcendentals = B_pad * HIDDEN            # single tanh pass over the slab
    bytes_accessed = (csz * (B_pad * S + S * HIDDEN + 2 * HIDDEN * HIDDEN)
                      + 4 * 3 * HIDDEN          # f32 biases
                      + osz * B_pad * HIDDEN)   # output slab

    fn = pl.pallas_call(
        functools.partial(policy_kernel, action_dim=A),
        out_shape=jax.ShapeDtypeStruct((B_pad, HIDDEN), out_dtype),
        grid_spec=pltpu.PrefetchScalarGridSpec(
            num_scalar_prefetch=0,
            grid=grid,
            in_specs=[
                batch_spec(S),                                            # states
                weight_spec((S, HIDDEN)), weight_spec((1, HIDDEN)),       # L1
                weight_spec((HIDDEN, HIDDEN)), weight_spec((1, HIDDEN)),  # L2
                weight_spec((HIDDEN, HIDDEN)), weight_spec((1, HIDDEN)),  # heads
            ],
            out_specs=batch_spec(HIDDEN),
        ),
        compiler_params=pltpu.CompilerParams(
            dimension_semantics=("parallel",)),
        cost_estimate=pl.CostEstimate(
            flops=flops,
            transcendentals=transcendentals,
            bytes_accessed=bytes_accessed),
    )

    out = fn(x, w1, b1, w2, b2, wh, bh)

    # TODO(synk): if downstream PPG value targets need full precision, run with
    # out_dtype=jnp.float32 (or emit the critic lane as a separate f32 output).
    act = out[:B, :A].astype(jnp.float32)
    std = out[:B, A:2 * A].astype(jnp.float32)
    crit = out[:B, 2 * A:2 * A + 1].astype(jnp.float32)
    return (act, std), crit


def policy_model_forward(states, packed_params, action_dim, *,
                         tb_max=2048, out_dtype=jnp.bfloat16):
    p = packed_params
    return _policy_forward(states, p["w1"], p["b1"], p["w2"], p["b2"],
                           p["wh"], p["bh"],
                           action_dim=action_dim, tb_max=tb_max,
                           out_dtype=out_dtype)


def init_params(key, state_dim, action_dim):
    """PyTorch nn.Linear-style init (U[-1/sqrt(fan_in), 1/sqrt(fan_in)]).
    Weights stored as [in, out]."""
    def linear(key, fan_in, fan_out):
        kw, kb = jax.random.split(key)
        bound = 1.0 / math.sqrt(fan_in)
        w = jax.random.uniform(kw, (fan_in, fan_out), jnp.float32, -bound, bound)
        b = jax.random.uniform(kb, (1, fan_out), jnp.float32, -bound, bound)
        return w, b

    keys = jax.random.split(key, 5)
    w1, b1 = linear(keys[0], state_dim, 128)
    w2, b2 = linear(keys[1], 128, 128)
    wa, ba = linear(keys[2], 64, action_dim)
    ws, bs = linear(keys[3], 64, action_dim)
    wc, bc = linear(keys[4], 64, 1)
    return dict(w1=w1, b1=b1, w2=w2, b2=b2,
                wa=wa, ba=ba, ws=ws, bs=bs, wc=wc, bc=bc)


def reference_forward(states, p):
    x = jnp.maximum(states @ p["w1"] + p["b1"], 0.0)
    x = jnp.maximum(x @ p["w2"] + p["b2"], 0.0)
    xa, xc = x[:, :64], x[:, 64:128]
    act = jnp.tanh(xa @ p["wa"] + p["ba"])
    std = jax.nn.sigmoid(xa @ p["ws"] + p["bs"])
    crt = xc @ p["wc"] + p["bc"]
    return (act, std), crt


if __name__ == "__main__":
    B, STATE_DIM, ACTION_DIM = 16, 32, 4

    key = jax.random.PRNGKey(0)
    k_states, k_params = jax.random.split(key)
    states = jax.random.normal(k_states, (B, STATE_DIM), jnp.float32)
    params = init_params(k_params, STATE_DIM, ACTION_DIM)
    (act_ref, std_ref), crit_ref = reference_forward(states, params)

    # 1) f32 path: tight check against the PyTorch-equivalent reference.
    p32, A = prepare_params(params, compute_dtype=jnp.float32)
    (act, std), crit = policy_model_forward(states, p32, A,
                                            out_dtype=jnp.float32)
    jax.block_until_ready((act, std, crit))
    np.testing.assert_allclose(np.asarray(act), np.asarray(act_ref),
                               rtol=1e-4, atol=1e-4)
    np.testing.assert_allclose(np.asarray(std), np.asarray(std_ref),
                               rtol=1e-4, atol=1e-4)
    np.testing.assert_allclose(np.asarray(crit), np.asarray(crit_ref),
                               rtol=1e-4, atol=1e-4)

    # 2) Default performance path (bf16 MXU inputs + bf16 output slab): loose
    #    check against the f32 reference.
    pbf, A = prepare_params(params)
    (act_b, std_b), crit_b = policy_model_forward(states, pbf, A)
    jax.block_until_ready((act_b, std_b, crit_b))
    np.testing.assert_allclose(np.asarray(act_b), np.asarray(act_ref),
                               rtol=5e-2, atol=5e-2)
    np.testing.assert_allclose(np.asarray(std_b), np.asarray(std_ref),
                               rtol=5e-2, atol=5e-2)
    np.testing.assert_allclose(np.asarray(crit_b), np.asarray(crit_ref),
                               rtol=5e-2, atol=5e-2)

    # 3) Ragged batch exercises the pad-to-tile / slice-back path.
    states3 = jax.random.normal(jax.random.PRNGKey(1), (50, STATE_DIM),
                                jnp.float32)
    (a3, s3), c3 = policy_model_forward(states3, pbf, A)
    jax.block_until_ready((a3, s3, c3))
    (a3r, s3r), c3r = reference_forward(states3, params)
    np.testing.assert_allclose(np.asarray(a3), np.asarray(a3r),
                               rtol=5e-2, atol=5e-2)
    np.testing.assert_allclose(np.asarray(c3), np.asarray(c3r),
                               rtol=5e-2, atol=5e-2)

    print("KERNEL_OK")
</pallas_src>

<mosaic_0001>
module attributes {stable_mosaic.version = 11 : i64} {
  func.func @policy_kernel(%arg0: i32, %arg1: memref<16x32xf32, #tpu.memory_space<vmem>>, %arg2: memref<32x128xf32, #tpu.memory_space<vmem>>, %arg3: memref<1x128xf32, #tpu.memory_space<vmem>>, %arg4: memref<128x128xf32, #tpu.memory_space<vmem>>, %arg5: memref<1x128xf32, #tpu.memory_space<vmem>>, %arg6: memref<128x128xf32, #tpu.memory_space<vmem>>, %arg7: memref<1x128xf32, #tpu.memory_space<vmem>>, %arg8: memref<16x128xf32, #tpu.memory_space<vmem>>) attributes {dimension_semantics = [#tpu.dimension_semantics<parallel>], iteration_bounds = array<i64: 1>, scalar_prefetch = 0 : i64, scratch_operands = 0 : i64, tpu.core_type = #tpu.core_type<tc>, window_params = [{transform_indices = @transform_0, window_bounds = array<i64: 16, 32>}, {pipeline_mode = #tpu.pipeline_mode<synchronous>, transform_indices = @transform_1, window_bounds = array<i64: 32, 128>}, {pipeline_mode = #tpu.pipeline_mode<synchronous>, transform_indices = @transform_2, window_bounds = array<i64: 1, 128>}, {pipeline_mode = #tpu.pipeline_mode<synchronous>, transform_indices = @transform_3, window_bounds = array<i64: 128, 128>}, {pipeline_mode = #tpu.pipeline_mode<synchronous>, transform_indices = @transform_4, window_bounds = array<i64: 1, 128>}, {pipeline_mode = #tpu.pipeline_mode<synchronous>, transform_indices = @transform_5, window_bounds = array<i64: 128, 128>}, {pipeline_mode = #tpu.pipeline_mode<synchronous>, transform_indices = @transform_6, window_bounds = array<i64: 1, 128>}, {transform_indices = @transform_7, window_bounds = array<i64: 16, 128>}]} {
    %c0 = arith.constant 0 : index
    %c0_0 = arith.constant 0 : index
    %0 = vector.load %arg1[%c0, %c0_0] : memref<16x32xf32, #tpu.memory_space<vmem>>, vector<16x32xf32>
    %c0_1 = arith.constant 0 : index
    %c0_2 = arith.constant 0 : index
    %1 = vector.load %arg2[%c0_1, %c0_2] : memref<32x128xf32, #tpu.memory_space<vmem>>, vector<32x128xf32>
    %cst = arith.constant dense<0.000000e+00> : vector<16x128xf32>
    %2 = tpu.matmul %0, %1, %cst {dimension_numbers = #tpu.dot_dimension_numbers<[1], [0], [0], [1], [0, 0, 1, 1], [], []>} : vector<16x32xf32>, vector<32x128xf32>, vector<16x128xf32> -> vector<16x128xf32>
    %c0_3 = arith.constant 0 : index
    %c0_4 = arith.constant 0 : index
    %3 = vector.load %arg3[%c0_3, %c0_4] : memref<1x128xf32, #tpu.memory_space<vmem>>, vector<1x128xf32>
    %4 = vector.broadcast %3 : vector<1x128xf32> to vector<16x128xf32>
    %5 = arith.addf %2, %4 : vector<16x128xf32>
    %cst_5 = arith.constant 0.000000e+00 : f32
    %6 = vector.broadcast %cst_5 : f32 to vector<16x128xf32>
    %7 = arith.maximumf %5, %6 : vector<16x128xf32>
    %c0_6 = arith.constant 0 : index
    %c0_7 = arith.constant 0 : index
    %8 = vector.load %arg4[%c0_6, %c0_7] : memref<128x128xf32, #tpu.memory_space<vmem>>, vector<128x128xf32>
    %cst_8 = arith.constant dense<0.000000e+00> : vector<16x128xf32>
    %9 = tpu.matmul %7, %8, %cst_8 {dimension_numbers = #tpu.dot_dimension_numbers<[1], [0], [0], [1], [0, 0, 1, 1], [], []>} : vector<16x128xf32>, vector<128x128xf32>, vector<16x128xf32> -> vector<16x128xf32>
    %c0_9 = arith.constant 0 : index
    %c0_10 = arith.constant 0 : index
    %10 = vector.load %arg5[%c0_9, %c0_10] : memref<1x128xf32, #tpu.memory_space<vmem>>, vector<1x128xf32>
    %11 = vector.broadcast %10 : vector<1x128xf32> to vector<16x128xf32>
    %12 = arith.addf %9, %11 : vector<16x128xf32>
    %cst_11 = arith.constant 0.000000e+00 : f32
    %13 = vector.broadcast %cst_11 : f32 to vector<16x128xf32>
    %14 = arith.maximumf %12, %13 : vector<16x128xf32>
    %c0_12 = arith.constant 0 : index
    %c0_13 = arith.constant 0 : index
    %15 = vector.load %arg6[%c0_12, %c0_13] : memref<128x128xf32, #tpu.memory_space<vmem>>, vector<128x128xf32>
    %cst_14 = arith.constant dense<0.000000e+00> : vector<16x128xf32>
    %16 = tpu.matmul %14, %15, %cst_14 {dimension_numbers = #tpu.dot_dimension_numbers<[1], [0], [0], [1], [0, 0, 1, 1], [], []>} : vector<16x128xf32>, vector<128x128xf32>, vector<16x128xf32> -> vector<16x128xf32>
    %c0_15 = arith.constant 0 : index
    %c0_16 = arith.constant 0 : index
    %17 = vector.load %arg7[%c0_15, %c0_16] : memref<1x128xf32, #tpu.memory_space<vmem>>, vector<1x128xf32>
    %18 = vector.broadcast %17 : vector<1x128xf32> to vector<16x128xf32>
    %19 = arith.addf %16, %18 : vector<16x128xf32>
    %20 = tpu.iota {dimensions = array<i32: 1>} : vector<16x128xi32>
    %c4_i32 = arith.constant 4 : i32
    %21 = vector.broadcast %c4_i32 : i32 to vector<16x128xi32>
    %22 = arith.cmpi slt, %20, %21 : vector<16x128xi32>
    %cst_17 = arith.constant 5.000000e-01 : f32
    %23 = vector.broadcast %cst_17 : f32 to vector<16x128xf32>
    %24 = arith.mulf %23, %19 : vector<16x128xf32>
    %25 = arith.select %22, %19, %24 : vector<16x128xi1>, vector<16x128xf32>
    %26 = math.tanh %25 : vector<16x128xf32>
    %c4_i32_18 = arith.constant 4 : i32
    %27 = vector.broadcast %c4_i32_18 : i32 to vector<16x128xi32>
    %28 = arith.cmpi slt, %20, %27 : vector<16x128xi32>
    %c8_i32 = arith.constant 8 : i32
    %29 = vector.broadcast %c8_i32 : i32 to vector<16x128xi32>
    %30 = arith.cmpi slt, %20, %29 : vector<16x128xi32>
    %cst_19 = arith.constant 5.000000e-01 : f32
    %31 = vector.broadcast %cst_19 : f32 to vector<16x128xf32>
    %32 = arith.mulf %31, %26 : vector<16x128xf32>
    %cst_20 = arith.constant 5.000000e-01 : f32
    %33 = vector.broadcast %cst_20 : f32 to vector<16x128xf32>
    %34 = arith.addf %32, %33 : vector<16x128xf32>
    %35 = arith.select %30, %34, %19 : vector<16x128xi1>, vector<16x128xf32>
    %36 = arith.select %28, %26, %35 : vector<16x128xi1>, vector<16x128xf32>
    %c0_21 = arith.constant 0 : index
    %c0_22 = arith.constant 0 : index
    %37 = vector.load %arg8[%c0_21, %c0_22] : memref<16x128xf32, #tpu.memory_space<vmem>>, vector<16x128xf32>
    tpu.vector_store %arg8[%c0_21, %c0_22], %36 {strides = array<i32>} : memref<16x128xf32, #tpu.memory_space<vmem>>, vector<16x128xf32>,
    return
  }
  func.func @transform_0(%arg0: i32) -> (i32, i32) {
    %c0_i32 = arith.constant 0 : i32
    %c0_i32_0 = arith.constant 0 : i32
    return %arg0, %c0_i32 : i32, i32
  }
  func.func @transform_1(%arg0: i32) -> (i32, i32) {
    %c0_i32 = arith.constant 0 : i32
    %c0_i32_0 = arith.constant 0 : i32
    %c0_i32_1 = arith.constant 0 : i32
    return %c0_i32, %c0_i32_0 : i32, i32
  }
  func.func @transform_2(%arg0: i32) -> (i32, i32) {
    %c0_i32 = arith.constant 0 : i32
    %c0_i32_0 = arith.constant 0 : i32
    %c0_i32_1 = arith.constant 0 : i32
    return %c0_i32, %c0_i32_0 : i32, i32
  }
  func.func @transform_3(%arg0: i32) -> (i32, i32) {
    %c0_i32 = arith.constant 0 : i32
    %c0_i32_0 = arith.constant 0 : i32
    %c0_i32_1 = arith.constant 0 : i32
    return %c0_i32, %c0_i32_0 : i32, i32
  }
  func.func @transform_4(%arg0: i32) -> (i32, i32) {
    %c0_i32 = arith.constant 0 : i32
    %c0_i32_0 = arith.constant 0 : i32
    %c0_i32_1 = arith.constant 0 : i32
    return %c0_i32, %c0_i32_0 : i32, i32
  }
  func.func @transform_5(%arg0: i32) -> (i32, i32) {
    %c0_i32 = arith.constant 0 : i32
    %c0_i32_0 = arith.constant 0 : i32
    %c0_i32_1 = arith.constant 0 : i32
    return %c0_i32, %c0_i32_0 : i32, i32
  }
  func.func @transform_6(%arg0: i32) -> (i32, i32) {
    %c0_i32 = arith.constant 0 : i32
    %c0_i32_0 = arith.constant 0 : i32
    %c0_i32_1 = arith.constant 0 : i32
    return %c0_i32, %c0_i32_0 : i32, i32
  }
  func.func @transform_7(%arg0: i32) -> (i32, i32) {
    %c0_i32 = arith.constant 0 : i32
    %c0_i32_0 = arith.constant 0 : i32
    return %arg0, %c0_i32 : i32, i32
  }
}

</mosaic_0001>

<llo_original>
// kernel: _policy_forward.1
$region0: #{_policy_forward.1}
  #allocation0 [shape = 'u32[]', space=smem, size = 0x4, offset = 0x4, fixed_abs, tag = 'smem constant byte address 0x4 - core index']
  #allocation1 [shape = 'u32[144,128]{1,0:T(1,128)}', space=vmem, size = 0x12000, scoped, tag = 'internal scratch']
  %s0 = inlined_call_operand.hbm [shape: f32[16,32], index: 0, kind: input, shape index: {}]
  %s1 = inlined_call_operand.hbm [shape: f32[32,128], index: 1, kind: input, shape index: {}]
  %s2 = inlined_call_operand.vmem [shape: f32[1,128], index: 2, kind: input, shape index: {}]
  %s3 = inlined_call_operand.hbm [shape: f32[128,128], index: 3, kind: input, shape index: {}]
  %s4 = inlined_call_operand.vmem [shape: f32[1,128], index: 4, kind: input, shape index: {}]
  %s5 = inlined_call_operand.hbm [shape: f32[128,128], index: 5, kind: input, shape index: {}]
  %s6 = inlined_call_operand.vmem [shape: f32[1,128], index: 6, kind: input, shape index: {}]
  %s7 = inlined_call_operand.vmem [shape: f32[16,128], index: 7, kind: output, shape index: {}]
  %s8 = sld [smem:[#allocation0]]
  $region54: #{_policy_forward.1} parent=0
    _
  %s10 = ssub.s32 1, %s8
  %s11 = scalar_select 0, %s10, %s8
  $region1: #{_policy_forward.1} parent=0
    #allocation2 [shape = 'u8[8192]{0}', space=vmem, size = 0x2000, scoped, tag = 'input window, operand 0, single buffered']
    #allocation3 [shape = 's32[1]{0}', space=sflag, size = 0x4, scoped, tag = 'scoped memory for _policy_forward.1']
    #allocation4 [shape = 'u8[16384]{0}', space=vmem, size = 0x4000, scoped, tag = 'input window, operand 1, single buffered']
    #allocation5 [shape = 's32[1]{0}', space=sflag, size = 0x4, scoped, tag = 'scoped memory for _policy_forward.1']
    #allocation6 [shape = 'u8[65536]{0}', space=vmem, size = 0x10000, scoped, tag = 'input window, operand 3, single buffered']
    #allocation7 [shape = 'u8[65536]{0}', space=vmem, size = 0x10000, scoped, tag = 'input window, operand 5, single buffered']
    #allocation8 [shape = 's32[1]{0}', space=sflag, size = 0x4, scoped, tag = 'scoped memory for _policy_forward.1']
    %12 = vsyncpa [#allocation3], 0
    %13 = vsyncpa [#allocation5], 0
    %14 = vsyncpa [#allocation8], 0
    // Predicated region
    $region2: #{_policy_forward.1} parent=1 // pred_check
      _
    $region3: #{_policy_forward.1} parent=1 // pred_check_branch
      %16 = sbr.rel (0) target = $region5
    $region4: #{_policy_forward.1} parent=1 // pred_region
      %s18 = ssub.s32 256, 256
      %19 = vsyncadd [#allocation3], %s18
      %s20 = sshll.u32 [#allocation2], 4
      %s21 = int_to_ptr.vmem [resolvable:$true] %s20
      %26 = dma.hbm_to_vmem [thread:$0]  %s0, 256, %s21, [#allocation3], 128, 128, 8
    $region5: #{_policy_forward.1} parent=1 // pred_fallthru
      _
    // Predicated region
    $region6: #{_policy_forward.1} parent=1 // pred_check
      _
    $region7: #{_policy_forward.1} parent=1 // pred_check_branch
      %28 = sbr.rel (0) target = $region9
    $region8: #{_policy_forward.1} parent=1 // pred_region
      %s30 = ssub.s32 512, 512
      %31 = vsyncadd [#allocation5], %s30
      %s32 = sshll.u32 [#allocation4], 4
      %s33 = int_to_ptr.vmem [resolvable:$true] %s32
      %38 = dma.hbm_to_vmem [thread:$0]  %s1, 512, %s33, [#allocation5], 128, 128, 8
    $region9: #{_policy_forward.1} parent=1 // pred_fallthru
      _
    // Predicated region
    $region10: #{_policy_forward.1} parent=1 // pred_check
      _
    $region11: #{_policy_forward.1} parent=1 // pred_check_branch
      %40 = sbr.rel (0) target = $region13
    $region12: #{_policy_forward.1} parent=1 // pred_region
      _
    $region13: #{_policy_forward.1} parent=1 // pred_fallthru
      _
    // Predicated region
    $region14: #{_policy_forward.1} parent=1 // pred_check
      _
    $region15: #{_policy_forward.1} parent=1 // pred_check_branch
      %42 = sbr.rel (0) target = $region17
    $region16: #{_policy_forward.1} parent=1 // pred_region
      %s44 = ssub.s32 2048, 2048
      %45 = vsyncadd [#allocation5], %s44
      %s46 = sshll.u32 [#allocation6], 4
      %s47 = int_to_ptr.vmem [resolvable:$true] %s46
      %52 = dma.hbm_to_vmem [thread:$0]  %s3, 2048, %s47, [#allocation5], 128, 128, 8
    $region17: #{_policy_forward.1} parent=1 // pred_fallthru
      _
    // Predicated region
    $region18: #{_policy_forward.1} parent=1 // pred_check
      _
    $region19: #{_policy_forward.1} parent=1 // pred_check_branch
      %54 = sbr.rel (0) target = $region21
    $region20: #{_policy_forward.1} parent=1 // pred_region
      _
    $region21: #{_policy_forward.1} parent=1 // pred_fallthru
      _
    // Predicated region
    $region22: #{_policy_forward.1} parent=1 // pred_check
      _
    $region23: #{_policy_forward.1} parent=1 // pred_check_branch
      %56 = sbr.rel (0) target = $region25
    $region24: #{_policy_forward.1} parent=1 // pred_region
      %s58 = ssub.s32 2048, 2048
      %59 = vsyncadd [#allocation8], %s58
      %s60 = sshll.u32 [#allocation7], 4
      %s61 = int_to_ptr.vmem [resolvable:$true] %s60
      %66 = dma.hbm_to_vmem [thread:$0]  %s5, 2048, %s61, [#allocation8], 128, 128, 8
    $region25: #{_policy_forward.1} parent=1 // pred_fallthru
      _
    // Predicated region
    $region26: #{_policy_forward.1} parent=1 // pred_check
      _
    $region27: #{_policy_forward.1} parent=1 // pred_check_branch
      %68 = sbr.rel (0) target = $region29
    $region28: #{_policy_forward.1} parent=1 // pred_region
      _
    $region29: #{_policy_forward.1} parent=1 // pred_fallthru
      _
    // Predicated region
    $region30: #{_policy_forward.1} parent=1 // pred_check
      _
    $region31: #{_policy_forward.1} parent=1 // pred_check_branch
      %70 = sbr.rel (0) target = $region33
    $region32: #{_policy_forward.1} parent=1 // pred_region
      %71 = dma.done [#allocation3], 256
    $region33: #{_policy_forward.1} parent=1 // pred_fallthru
      _
    // Predicated region
    $region34: #{_policy_forward.1} parent=1 // pred_check
      _
    $region35: #{_policy_forward.1} parent=1 // pred_check_branch
      %73 = sbr.rel (0) target = $region37
    $region36: #{_policy_forward.1} parent=1 // pred_region
      %74 = dma.done [#allocation5], 512
    $region37: #{_policy_forward.1} parent=1 // pred_fallthru
      _
    // Predicated region
    $region38: #{_policy_forward.1} parent=1 // pred_check
      _
    $region39: #{_policy_forward.1} parent=1 // pred_check_branch
      %76 = sbr.rel (0) target = $region41
    $region40: #{_policy_forward.1} parent=1 // pred_region
      %77 = dma.done [#allocation5], 2048
    $region41: #{_policy_forward.1} parent=1 // pred_fallthru
      _
    // Predicated region
    $region42: #{_policy_forward.1} parent=1 // pred_check
      _
    $region43: #{_policy_forward.1} parent=1 // pred_check_branch
      %79 = sbr.rel (0) target = $region45
    $region44: #{_policy_forward.1} parent=1 // pred_region
      %80 = dma.done [#allocation8], 2048
    $region45: #{_policy_forward.1} parent=1 // pred_fallthru
      _
    %v81 = vld [vmem:[#allocation2] sm:$0xff]
    %v82 = vld [vmem:[#allocation2 + $0x8] sm:$0xff]
    %v83 = vld [vmem:[#allocation4] sm:$0xff]
    %v84 = vld [vmem:[#allocation4 + $0x8] sm:$0xff]
    %v85 = vld [vmem:[#allocation4 + $0x10] sm:$0xff]
    %v86 = vld [vmem:[#allocation4 + $0x18] sm:$0xff]
    %v87 = vld [vmem:[%s2] sm:$0x1]
    %v89 = vlaneseq
    %v90 = vshrl.u32 %v89, 7
    %v91 = vsub.s32 0, %v90
    %v92 = vrot.slane %v87, %v91
    %vm94 = vcmask 261120
    %v96 = vsel %vm94, %v81, 0
    %v99 = vsel %vm94, %v82, 0
    %101 = vmatprep.subr.mxu0 0.0
    %102 = vmatpush1.msra.mxu0 %v83
    %103 = vmatprep.subr.mxu0 0.0
    %104 = vmatpush1.msra.mxu0 %v84
    %105 = vmatprep.subr.mxu0 0.0
    %106 = vmatpush1.msra.mxu0 %v85
    %107 = vmatprep.subr.mxu0 0.0
    %108 = vmatpush1.msra.mxu0 %v86
    %109 = vmatprep.subr.mxu0 0.0
    %110 = vmatpush1.msra.mxu0 0.0
    %111 = vmatprep.subr.mxu0 0.0
    %112 = vmatpush1.msra.mxu0 0.0
    %113 = vmatprep.subr.mxu0 0.0
    %114 = vmatpush1.msra.mxu0 0.0
    %115 = vmatprep.subr.mxu0 0.0
    %116 = vmatpush1.msra.mxu0 0.0
    %117 = vmatprep.subr.mxu0 0.0
    %118 = vmatpush1.msra.mxu0 0.0
    %119 = vmatprep.subr.mxu0 0.0
    %120 = vmatpush1.msra.mxu0 0.0
    %121 = vmatprep.subr.mxu0 0.0
    %122 = vmatpush1.msra.mxu0 0.0
    %123 = vmatprep.subr.mxu0 0.0
    %124 = vmatpush1.msra.mxu0 0.0
    %125 = vmatprep.subr.mxu0 0.0
    %126 = vmatpush1.msra.mxu0 0.0
    %127 = vmatprep.subr.mxu0 0.0
    %128 = vmatpush1.msra.mxu0 0.0
    %129 = vmatprep.subr.mxu0 0.0
    %130 = vmatpush1.msra.mxu0 0.0
    %131 = vmatprep.subr.mxu0 0.0
    %132 = vmatpush1.msra.mxu0 0.0
    %133 = vmatprep.subr.mxu0 0.0
    %134 = vmatpush1.msra.mxu0 0.0
    %135 = vmatprep.subr.mxu0 0.0
    %136 = vmatpush1.msra.mxu0 0.0
    %137 = vmatprep.subr.mxu0 0.0
    %138 = vmatpush1.msra.mxu0 0.0
    %139 = vmatprep.subr.mxu0 0.0
    %140 = vmatpush1.msra.mxu0 0.0
    %141 = vmatprep.subr.mxu0 0.0
    %142 = vmatpush1.msra.mxu0 0.0
    %143 = vmatprep.subr.mxu0 0.0
    %144 = vmatpush1.msra.mxu0 0.0
    %145 = vmatprep.subr.mxu0 0.0
    %146 = vmatpush1.msra.mxu0 0.0
    %147 = vmatprep.subr.mxu0 0.0
    %148 = vmatpush1.msra.mxu0 0.0
    %149 = vmatprep.subr.mxu0 0.0
    %150 = vmatpush1.msra.mxu0 0.0
    %151 = vmatprep.subr.mxu0 0.0
    %152 = vmatpush1.msra.mxu0 0.0
    %153 = vmatprep.subr.mxu0 0.0
    %154 = vmatpush1.msra.mxu0 0.0
    %155 = vmatprep.subr.mxu0 0.0
    %156 = vmatpush1.msra.mxu0 0.0
    %157 = vmatprep.subr.mxu0 0.0
    %158 = vmatpush1.msra.mxu0 0.0
    %159 = vmatprep.subr.mxu0 0.0
    %160 = vmatpush1.msra.mxu0 0.0
    %161 = vmatprep.subr.mxu0 0.0
    %162 = vmatpush1.msra.mxu0 0.0
    %163 = vmatprep.subr.mxu0 0.0
    %164 = vmatpush1.msra.mxu0 0.0
    %165 = vmatprep.mubr.f32.mxu0 0.0
    %166 = vmatmul.mubr.f32.gmra.mrb[0].mxu0 %v96
    %v167 = vpop.f32.mrb[0].mxu0
    %v168 = vadd.f32 %v92, %v167
    %v169 = vpop.f32.mrb[0].mxu0
    %170 = vmatprep.mubr.f32.mxu0 0.0
    %171 = vmatmul.mubr.f32.gmra.mrb[0].mxu0 %v99
    %v172 = vpop.f32.mrb[0].mxu0
    %v173 = vadd.f32 %v92, %v172
    %v174 = vpop.f32.mrb[0].mxu0
    %175 = vdwg.mxu0
    %v176 = vmax.f32 %v168, 0.0
    %v177 = vmax.f32 %v173, 0.0
    %v178 = vld [vmem:[#allocation6] sm:$0xff]
    %v179 = vld [vmem:[#allocation6 + $0x8] sm:$0xff]
    %v180 = vld [vmem:[#allocation6 + $0x10] sm:$0xff]
    %v181 = vld [vmem:[#allocation6 + $0x18] sm:$0xff]
    %v182 = vld [vmem:[#allocation6 + $0x20] sm:$0xff]
    %v183 = vld [vmem:[#allocation6 + $0x28] sm:$0xff]
    %v184 = vld [vmem:[#allocation6 + $0x30] sm:$0xff]
    %v185 = vld [vmem:[#allocation6 + $0x38] sm:$0xff]
    %v186 = vld [vmem:[#allocation6 + $0x40] sm:$0xff]
    %v187 = vld [vmem:[#allocation6 + $0x48] sm:$0xff]
    %v188 = vld [vmem:[#allocation6 + $0x50] sm:$0xff]
    %v189 = vld [vmem:[#allocation6 + $0x58] sm:$0xff]
    %v190 = vld [vmem:[#allocation6 + $0x60] sm:$0xff]
    %v191 = vld [vmem:[#allocation6 + $0x68] sm:$0xff]
    %v192 = vld [vmem:[#allocation6 + $0x70] sm:$0xff]
    %v193 = vld [vmem:[#allocation6 + $0x78] sm:$0xff]
    %v194 = vld [vmem:[%s4] sm:$0x1]
    %v196 = vlaneseq
    %v197 = vshrl.u32 %v196, 7
    %v198 = vsub.s32 0, %v197
    %v199 = vrot.slane %v194, %v198
    %201 = vmatprep.subr.mxu0 0.0
    %202 = vmatpush1.msra.mxu0 %v178
    %203 = vmatprep.subr.mxu0 0.0
    %204 = vmatpush1.msra.mxu0 %v179
    %205 = vmatprep.subr.mxu0 0.0
    %206 = vmatpush1.msra.mxu0 %v180
    %207 = vmatprep.subr.mxu0 0.0
    %208 = vmatpush1.msra.mxu0 %v181
    %209 = vmatprep.subr.mxu0 0.0
    %210 = vmatpush1.msra.mxu0 %v182
    %211 = vmatprep.subr.mxu0 0.0
    %212 = vmatpush1.msra.mxu0 %v183
    %213 = vmatprep.subr.mxu0 0.0
    %214 = vmatpush1.msra.mxu0 %v184
    %215 = vmatprep.subr.mxu0 0.0
    %216 = vmatpush1.msra.mxu0 %v185
    %217 = vmatprep.subr.mxu0 0.0
    %218 = vmatpush1.msra.mxu0 %v186
    %219 = vmatprep.subr.mxu0 0.0
    %220 = vmatpush1.msra.mxu0 %v187
    %221 = vmatprep.subr.mxu0 0.0
    %222 = vmatpush1.msra.mxu0 %v188
    %223 = vmatprep.subr.mxu0 0.0
    %224 = vmatpush1.msra.mxu0 %v189
    %225 = vmatprep.subr.mxu0 0.0
    %226 = vmatpush1.msra.mxu0 %v190
    %227 = vmatprep.subr.mxu0 0.0
    %228 = vmatpush1.msra.mxu0 %v191
    %229 = vmatprep.subr.mxu0 0.0
    %230 = vmatpush1.msra.mxu0 %v192
    %231 = vmatprep.subr.mxu0 0.0
    %232 = vmatpush1.msra.mxu0 %v193
    %233 = vmatprep.subr.mxu0 0.0
    %234 = vmatpush1.msra.mxu0 0.0
    %235 = vmatprep.subr.mxu0 0.0
    %236 = vmatpush1.msra.mxu0 0.0
    %237 = vmatprep.subr.mxu0 0.0
    %238 = vmatpush1.msra.mxu0 0.0
    %239 = vmatprep.subr.mxu0 0.0
    %240 = vmatpush1.msra.mxu0 0.0
    %241 = vmatprep.subr.mxu0 0.0
    %242 = vmatpush1.msra.mxu0 0.0
    %243 = vmatprep.subr.mxu0 0.0
    %244 = vmatpush1.msra.mxu0 0.0
    %245 = vmatprep.subr.mxu0 0.0
    %246 = vmatpush1.msra.mxu0 0.0
    %247 = vmatprep.subr.mxu0 0.0
    %248 = vmatpush1.msra.mxu0 0.0
    %249 = vmatprep.subr.mxu0 0.0
    %250 = vmatpush1.msra.mxu0 0.0
    %251 = vmatprep.subr.mxu0 0.0
    %252 = vmatpush1.msra.mxu0 0.0
    %253 = vmatprep.subr.mxu0 0.0
    %254 = vmatpush1.msra.mxu0 0.0
    %255 = vmatprep.subr.mxu0 0.0
    %256 = vmatpush1.msra.mxu0 0.0
    %257 = vmatprep.subr.mxu0 0.0
    %258 = vmatpush1.msra.mxu0 0.0
    %259 = vmatprep.subr.mxu0 0.0
    %260 = vmatpush1.msra.mxu0 0.0
    %261 = vmatprep.subr.mxu0 0.0
    %262 = vmatpush1.msra.mxu0 0.0
    %263 = vmatprep.subr.mxu0 0.0
    %264 = vmatpush1.msra.mxu0 0.0
    %265 = vmatprep.mubr.f32.mxu0 0.0
    %266 = vmatmul.mubr.f32.gmra.mrb[0].mxu0 %v176
    %v267 = vpop.f32.mrb[0].mxu0
    %v268 = vadd.f32 %v199, %v267
    %v269 = vpop.f32.mrb[0].mxu0
    %270 = vmatprep.mubr.f32.mxu0 0.0
    %271 = vmatmul.mubr.f32.gmra.mrb[0].mxu0 %v177
    %v272 = vpop.f32.mrb[0].mxu0
    %v273 = vadd.f32 %v199, %v272
    %v274 = vpop.f32.mrb[0].mxu0
    %275 = vdwg.mxu0
    %v276 = vmax.f32 %v268, 0.0
    %v277 = vmax.f32 %v273, 0.0
    %v278 = vld [vmem:[#allocation7] sm:$0xff]
    %v279 = vld [vmem:[#allocation7 + $0x8] sm:$0xff]
    %v280 = vld [vmem:[#allocation7 + $0x10] sm:$0xff]
    %v281 = vld [vmem:[#allocation7 + $0x18] sm:$0xff]
    %v282 = vld [vmem:[#allocation7 + $0x20] sm:$0xff]
    %v283 = vld [vmem:[#allocation7 + $0x28] sm:$0xff]
    %v284 = vld [vmem:[#allocation7 + $0x30] sm:$0xff]
    %v285 = vld [vmem:[#allocation7 + $0x38] sm:$0xff]
    %v286 = vld [vmem:[#allocation7 + $0x40] sm:$0xff]
    %v287 = vld [vmem:[#allocation7 + $0x48] sm:$0xff]
    %v288 = vld [vmem:[#allocation7 + $0x50] sm:$0xff]
    %v289 = vld [vmem:[#allocation7 + $0x58] sm:$0xff]
    %v290 = vld [vmem:[#allocation7 + $0x60] sm:$0xff]
    %v291 = vld [vmem:[#allocation7 + $0x68] sm:$0xff]
    %v292 = vld [vmem:[#allocation7 + $0x70] sm:$0xff]
    %v293 = vld [vmem:[#allocation7 + $0x78] sm:$0xff]
    %v294 = vld [vmem:[%s6] sm:$0x1]
    %v296 = vlaneseq
    %v297 = vshrl.u32 %v296, 7
    %v298 = vsub.s32 0, %v297
    %v299 = vrot.slane %v294, %v298
    %301 = vmatprep.subr.mxu0 0.0
    %302 = vmatpush1.msra.mxu0 %v278
    %303 = vmatprep.subr.mxu0 0.0
    %304 = vmatpush1.msra.mxu0 %v279
    %305 = vmatprep.subr.mxu0 0.0
    %306 = vmatpush1.msra.mxu0 %v280
    %307 = vmatprep.subr.mxu0 0.0
    %308 = vmatpush1.msra.mxu0 %v281
    %309 = vmatprep.subr.mxu0 0.0
    %310 = vmatpush1.msra.mxu0 %v282
    %311 = vmatprep.subr.mxu0 0.0
    %312 = vmatpush1.msra.mxu0 %v283
    %313 = vmatprep.subr.mxu0 0.0
    %314 = vmatpush1.msra.mxu0 %v284
    %315 = vmatprep.subr.mxu0 0.0
    %316 = vmatpush1.msra.mxu0 %v285
    %317 = vmatprep.subr.mxu0 0.0
    %318 = vmatpush1.msra.mxu0 %v286
    %319 = vmatprep.subr.mxu0 0.0
    %320 = vmatpush1.msra.mxu0 %v287
    %321 = vmatprep.subr.mxu0 0.0
    %322 = vmatpush1.msra.mxu0 %v288
    %323 = vmatprep.subr.mxu0 0.0
    %324 = vmatpush1.msra.mxu0 %v289
    %325 = vmatprep.subr.mxu0 0.0
    %326 = vmatpush1.msra.mxu0 %v290
    %327 = vmatprep.subr.mxu0 0.0
    %328 = vmatpush1.msra.mxu0 %v291
    %329 = vmatprep.subr.mxu0 0.0
    %330 = vmatpush1.msra.mxu0 %v292
    %331 = vmatprep.subr.mxu0 0.0
    %332 = vmatpush1.msra.mxu0 %v293
    %333 = vmatprep.subr.mxu0 0.0
    %334 = vmatpush1.msra.mxu0 0.0
    %335 = vmatprep.subr.mxu0 0.0
    %336 = vmatpush1.msra.mxu0 0.0
    %337 = vmatprep.subr.mxu0 0.0
    %338 = vmatpush1.msra.mxu0 0.0
    %339 = vmatprep.subr.mxu0 0.0
    %340 = vmatpush1.msra.mxu0 0.0
    %341 = vmatprep.subr.mxu0 0.0
    %342 = vmatpush1.msra.mxu0 0.0
    %343 = vmatprep.subr.mxu0 0.0
    %344 = vmatpush1.msra.mxu0 0.0
    %345 = vmatprep.subr.mxu0 0.0
    %346 = vmatpush1.msra.mxu0 0.0
    %347 = vmatprep.subr.mxu0 0.0
    %348 = vmatpush1.msra.mxu0 0.0
    %349 = vmatprep.subr.mxu0 0.0
    %350 = vmatpush1.msra.mxu0 0.0
    %351 = vmatprep.subr.mxu0 0.0
    %352 = vmatpush1.msra.mxu0 0.0
    %353 = vmatprep.subr.mxu0 0.0
    %354 = vmatpush1.msra.mxu0 0.0
    %355 = vmatprep.subr.mxu0 0.0
    %356 = vmatpush1.msra.mxu0 0.0
    %357 = vmatprep.subr.mxu0 0.0
    %358 = vmatpush1.msra.mxu0 0.0
    %359 = vmatprep.subr.mxu0 0.0
    %360 = vmatpush1.msra.mxu0 0.0
    %361 = vmatprep.subr.mxu0 0.0
    %362 = vmatpush1.msra.mxu0 0.0
    %363 = vmatprep.subr.mxu0 0.0
    %364 = vmatpush1.msra.mxu0 0.0
    %365 = vmatprep.mubr.f32.mxu0 0.0
    %366 = vmatmul.mubr.f32.gmra.mrb[0].mxu0 %v276
    %v367 = vpop.f32.mrb[0].mxu0
    %v368 = vadd.f32 %v299, %v367
    %v369 = vpop.f32.mrb[0].mxu0
    %370 = vmatprep.mubr.f32.mxu0 0.0
    %371 = vmatmul.mubr.f32.gmra.mrb[0].mxu0 %v277
    %v372 = vpop.f32.mrb[0].mxu0
    %v373 = vadd.f32 %v299, %v372
    %v374 = vpop.f32.mrb[0].mxu0
    %375 = vdwg.mxu0
    %v376 = vlaneseq
    %v377 = vand.u32 %v376, 127
    %vm378 = vcmp.lt.s32.totalorder %v377, 4
    %v379 = vmul.f32 %v368, 0.5
    %v380 = vmul.f32 %v373, 0.5
    %v381 = vsel %vm378, %v368, %v379
    %v382 = vsel %vm378, %v373, %v380
    %v383 = vtanh.pop %v381
    %v384 = vtanh.pop %v382
    %vm385 = vcmp.lt.s32.totalorder %v377, 8
    %v386 = vmul.f32 %v383, 0.5
    %v387 = vmul.f32 %v384, 0.5
    %v388 = vadd.f32 %v386, 0.5
    %v389 = vadd.f32 %v387, 0.5
    %v390 = vsel %vm385, %v388, %v368
    %v391 = vsel %vm385, %v389, %v373
    %v392 = vsel %vm378, %v383, %v390
    %v393 = vsel %vm378, %v384, %v391
    %394 = vst [vmem:[%s7] sm:$0xff] %v392
    %395 = vst [vmem:[%s7 + $0x8] sm:$0xff] %v393
    // Predicated region
    $region46: #{_policy_forward.1} parent=1 // pred_check
      _
    $region47: #{_policy_forward.1} parent=1 // pred_check_branch
      %397 = sbr.rel (0) target = $region49
    $region48: #{_policy_forward.1} parent=1 // pred_region
      _
    $region49: #{_policy_forward.1} parent=1 // pred_fallthru
      _
    // Predicated region
    $region50: #{_policy_forward.1} parent=1 // pred_check
      _
    $region51: #{_policy_forward.1} parent=1 // pred_check_branch
      %399 = sbr.rel (0) target = $region53
    $region52: #{_policy_forward.1} parent=1 // pred_region
      _
    $region53: #{_policy_forward.1} parent=1 // pred_fallthru
      _
    %400 = vsyncpa [#allocation3], 1
    %401 = vsyncpa [#allocation5], 1
    %402 = vsyncpa [#allocation8], 1

</llo_original>
